<compile_context>
chip_gen: v7x
topology: tpu7x:2x2x1
jax: 0.10.0
libtpu: 0.0.40
codegen_flags: <defaults>
</compile_context>

<pallas_src>
import jax
import jax.numpy as jnp
from jax.experimental import pallas as pl
from jax.experimental.pallas import tpu as pltpu


# ----------------------------------------------------------------------------- kernel


def _elu(v):
    # F.elu, alpha=1.0; clamp the exp argument on the positive branch.
    return jnp.where(v > 0, v, jnp.exp(jnp.minimum(v, 0.0)) - 1.0)


def residual_block_kernel(x_ref, w1_ref, sh1_ref, w2_ref, sh2_ref,
                          p_ref, sd_ref, su_ref, o_ref):
    """Single invocation over the whole (N*H, W*C) slab (no grid).

    x_ref  : (NH, WCi)     f32   lane-dense input slab (all batches stacked)
    w1_ref : (WCi, 3*WCo)  bf16  conv_1 block-diag taps, fused on output axis (BN1 folded)
    sh1_ref: (1, WCo)      f32   folded conv_1 bias + BN1 shift
    w2_ref : (WCo, 3*WCo)  bf16  conv_2 block-diag taps, fused on output axis (BN2 folded)
    sh2_ref: (1, WCo)      f32   folded conv_2 bias + BN2 shift
    p_ref  : (WCi, WCo)    f32   0/1 channel-pad matrix (residual)
    sd_ref : (NH, NH)      f32   0/1 "read t-d" shift operator (batch-boundary aware)
    su_ref : (NH, NH)      f32   0/1 "read t+d" shift operator (batch-boundary aware)
    o_ref  : (NH, WCo)     f32   output slab
    """
    x = x_ref[...]
    sd = sd_ref[...]
    su = su_ref[...]
    wco = o_ref.shape[-1]

    def dconv(inp, w_ref, sh_ref):
        # Single fused contraction: all 3 dilation taps along the output axis.
        # bf16 operands, f32 accumulation.
        y = jnp.dot(inp.astype(jnp.bfloat16), w_ref[...],
                    preferred_element_type=jnp.float32)            # (NH, 3*WCo)
        y0 = y[:, :wco]               # tap 0: needs value at t-d
        y1 = y[:, wco:2 * wco]        # tap 1: value at t
        y2 = y[:, 2 * wco:]           # tap 2: needs value at t+d
        # Temporal shift + per-batch "same"-padding zeroing as exact 0/1
        # matmuls on the MXU: no halo scratch, no VMEM store/reload round trip.
        t0 = jnp.dot(sd, y0, preferred_element_type=jnp.float32)   # y0[t-d] or 0
        t2 = jnp.dot(su, y2, preferred_element_type=jnp.float32)   # y2[t+d] or 0
        return t0 + y1 + t2 + sh_ref[...]                          # folded bias + BN

    stack1 = _elu(dconv(x, w1_ref, sh1_ref))                       # (NH, WCo)
    stack2 = dconv(stack1, w2_ref, sh2_ref)                        # (NH, WCo)
    # residual = channel-zero-padded x (exact, f32)
    residual = jnp.dot(x, p_ref[...], preferred_element_type=jnp.float32)
    o_ref[...] = _elu(residual + stack2)


# ----------------------------------------------------------------------------- wrapper


def _prepare(params, dilation, x_shape, eps=1e-4):
    """Parameter/shape-only preprocessing.  Pure function of the weights and
    static shapes: run it once and reuse the result across forward calls."""
    d = int(dilation[0])
    (w1, b1, g1, be1, rm1, rv1,
     w2, b2, g2, be2, rm2, rv2) = params

    Cout, Cin, K = int(w1.shape[0]), int(w1.shape[1]), int(w1.shape[2])
    assert K == 3, "kernel assumes filter_time_length == 3"
    N, _, H, W = (int(s) for s in x_shape)
    n_pad = Cout - Cin
    assert n_pad % 2 == 0
    half = n_pad // 2
    NH, WCi, WCo = N * H, W * Cin, W * Cout

    # --- fold conv bias + BN (running stats) into weights / a single shift ---
    def fold(w, b, g, be, rm, rv):
        scale = (g / jnp.sqrt(rv + eps)).astype(jnp.float32)                  # (Co,)
        shift = (b.astype(jnp.float32) * scale + be - rm * scale).astype(jnp.float32)
        # torch conv weight (Co, Ci, K, 1) -> per-tap (K, Ci, Co), BN-scaled
        wk = jnp.transpose(w[..., 0], (2, 1, 0)).astype(jnp.float32) * scale[None, None, :]
        return wk, shift

    w1k, sh1 = fold(w1, b1, g1, be1, rm1, rv1)         # (3, Cin, Cout), (Cout,)
    w2k, sh2 = fold(w2, b2, g2, be2, rm2, rv2)         # (3, Cout, Cout), (Cout,)

    # --- block-diag (lane-dense) expansion; taps concatenated on output axis --
    eye_w = jnp.eye(W, dtype=jnp.float32)
    w1cat = jnp.concatenate([jnp.kron(eye_w, w1k[k]) for k in range(3)],
                            axis=1).astype(jnp.bfloat16)            # (WCi, 3*WCo)
    w2cat = jnp.concatenate([jnp.kron(eye_w, w2k[k]) for k in range(3)],
                            axis=1).astype(jnp.bfloat16)            # (WCo, 3*WCo)
    sh1bd = jnp.tile(sh1, (W,)).reshape(1, WCo)
    sh2bd = jnp.tile(sh2, (W,)).reshape(1, WCo)

    pad_mat = jnp.zeros((Cin, Cout), jnp.float32).at[
        jnp.arange(Cin), half + jnp.arange(Cin)].set(1.0)
    pbd = jnp.kron(eye_w, pad_mat)                                  # (WCi, WCo)

    # --- 0/1 temporal shift operators, per-batch "same" padding folded in ----
    #   sd[r, r'] = 1  iff  r' == r - d  and  (r mod H) >= d        (tap 0)
    #   su[r, r'] = 1  iff  r' == r + d  and  (r mod H) <  H - d    (tap 2)
    r = jnp.arange(NH)
    sd = (((r[:, None] - d) == r[None, :]) & ((r % H) >= d)[:, None]).astype(jnp.float32)
    su = (((r[:, None] + d) == r[None, :]) & ((r % H) < H - d)[:, None]).astype(jnp.float32)

    packed = (w1cat, sh1bd, w2cat, sh2bd, pbd, sd, su)
    meta = dict(N=N, Cin=Cin, H=H, W=W, Cout=Cout, NH=NH, WCi=WCi, WCo=WCo)
    return packed, meta


def make_residual_block(params, dilation, x_shape):
    """Build a jitted forward fn; parameter preprocessing runs exactly once."""
    packed, m = _prepare(params, dilation, x_shape)
    N, H, W, Cout = m["N"], m["H"], m["W"], m["Cout"]
    NH, WCi, WCo = m["NH"], m["WCi"], m["WCo"]

    cost = pl.CostEstimate(
        flops=2 * NH * (WCi * 3 * WCo + WCo * 3 * WCo + WCi * WCo)
              + 4 * 2 * NH * NH * WCo,
        transcendentals=2 * NH * WCo,
        bytes_accessed=4 * NH * WCi                      # x (f32)
                       + 2 * WCi * 3 * WCo + 2 * WCo * 3 * WCo   # bf16 weights
                       + 4 * WCi * WCo + 2 * 4 * NH * NH         # pad + shift ops
                       + 2 * 4 * WCo                              # shifts
                       + 4 * NH * WCo,                            # output
    )

    call = pl.pallas_call(
        residual_block_kernel,
        out_shape=jax.ShapeDtypeStruct((NH, WCo), jnp.float32),
        # no grid: whole (tiny) working set lives in VMEM for one invocation
        in_specs=[pl.BlockSpec(memory_space=pltpu.MemorySpace.VMEM)
                  for _ in range(8)],
        out_specs=pl.BlockSpec(memory_space=pltpu.MemorySpace.VMEM),
        compiler_params=pltpu.CompilerParams(vmem_limit_bytes=32 * 1024 * 1024),
        cost_estimate=cost,
    )

    @jax.jit
    def forward(x_nchw):
        # layout glue at the module boundary: NCHW -> lane-dense (N*H, W*Cin)
        x2d = jnp.transpose(x_nchw, (0, 2, 3, 1)).astype(jnp.float32).reshape(NH, WCi)
        o2d = call(x2d, *packed)
        return jnp.transpose(o2d.reshape(N, H, W, Cout), (0, 3, 1, 2))

    return forward


def residual_block_forward(x_nchw, params, dilation):
    """One-shot convenience wrapper (prefer make_residual_block for reuse)."""
    return make_residual_block(params, dilation, x_nchw.shape)(x_nchw)


# ----------------------------------------------------------------------------- reference (pure JAX, same semantics)


def residual_block_reference(x_nchw, params, dilation):
    d = int(dilation[0])
    eps = 1e-4
    (w1, b1, g1, be1, rm1, rv1,
     w2, b2, g2, be2, rm2, rv2) = params
    Cout, Cin = w1.shape[0], w1.shape[1]
    N, _, H, W = x_nchw.shape
    half = (Cout - Cin) // 2

    x = jnp.transpose(x_nchw, (0, 2, 3, 1)).astype(jnp.float32)

    def conv(inp, w, b):
        wk = jnp.transpose(w[..., 0], (2, 1, 0))
        xp = jnp.pad(inp, ((0, 0), (d, d), (0, 0), (0, 0)))
        out = sum(jnp.einsum('nhwc,cd->nhwd', xp[:, k * d:k * d + H], wk[k])
                  for k in range(3))
        return out + b

    def bn(v, g, be, rm, rv):
        scale = g / jnp.sqrt(rv + eps)
        return v * scale + (be - rm * scale)

    def elu(v):
        return jnp.where(v > 0, v, jnp.exp(jnp.minimum(v, 0.0)) - 1.0)

    s1 = elu(bn(conv(x, w1, b1), g1, be1, rm1, rv1))
    s2 = bn(conv(s1, w2, b2), g2, be2, rm2, rv2)
    x_res = jnp.pad(x, ((0, 0), (0, 0), (0, 0), (half, half)))
    out = elu(x_res + s2)
    return jnp.transpose(out, (0, 3, 1, 2))


# ----------------------------------------------------------------------------- main


if __name__ == "__main__":
    # Shapes consistent with the module: NCHW = (2, 4, 16, 16),
    # in_filters=4, out_num_filters=8, dilation=(2, 1), filter_time_length=3.
    N, Cin, H, W = 2, 4, 16, 16
    Cout = 8
    K = 3
    dilation = (2, 1)

    key = jax.random.PRNGKey(0)
    ks = jax.random.split(key, 13)

    x = jax.random.normal(ks[0], (N, Cin, H, W), jnp.float32)

    params = (
        0.1 * jax.random.normal(ks[1], (Cout, Cin, K, 1), jnp.float32),       # conv_1 weight
        0.1 * jax.random.normal(ks[2], (Cout,), jnp.float32),                 # conv_1 bias
        1.0 + 0.1 * jax.random.normal(ks[3], (Cout,), jnp.float32),           # bn1 gamma
        0.1 * jax.random.normal(ks[4], (Cout,), jnp.float32),                 # bn1 beta
        0.1 * jax.random.normal(ks[5], (Cout,), jnp.float32),                 # bn1 running_mean
        1.0 + 0.1 * jnp.abs(jax.random.normal(ks[6], (Cout,), jnp.float32)),  # bn1 running_var
        0.1 * jax.random.normal(ks[7], (Cout, Cout, K, 1), jnp.float32),      # conv_2 weight
        0.1 * jax.random.normal(ks[8], (Cout,), jnp.float32),                 # conv_2 bias
        1.0 + 0.1 * jax.random.normal(ks[9], (Cout,), jnp.float32),           # bn2 gamma
        0.1 * jax.random.normal(ks[10], (Cout,), jnp.float32),                # bn2 beta
        0.1 * jax.random.normal(ks[11], (Cout,), jnp.float32),                # bn2 running_mean
        1.0 + 0.1 * jnp.abs(jax.random.normal(ks[12], (Cout,), jnp.float32)), # bn2 running_var
    )

    # Param-only preprocessing hoisted: build once, reuse across calls.
    fwd = make_residual_block(params, dilation, x.shape)
    out = jax.block_until_ready(fwd(x))

    ref = jax.block_until_ready(residual_block_reference(x, params, dilation))
    assert out.shape == (N, Cout, H, W)
    # bf16 matmul operands (f32 accumulation) -> relaxed tolerance vs the f32
    # reference; the residual path is exact f32.
    err = float(jnp.max(jnp.abs(out - ref)))
    assert jnp.allclose(out, ref, atol=3e-2, rtol=3e-2), err

    print("KERNEL_OK")
</pallas_src>

<mosaic_0001>
module attributes {stable_mosaic.version = 11 : i64} {
  func.func @residual_block_kernel(%arg0: memref<32x64xf32, #tpu.memory_space<vmem>>, %arg1: memref<64x384xbf16, #tpu.memory_space<vmem>>, %arg2: memref<1x128xf32, #tpu.memory_space<vmem>>, %arg3: memref<128x384xbf16, #tpu.memory_space<vmem>>, %arg4: memref<1x128xf32, #tpu.memory_space<vmem>>, %arg5: memref<64x128xf32, #tpu.memory_space<vmem>>, %arg6: memref<32x32xf32, #tpu.memory_space<vmem>>, %arg7: memref<32x32xf32, #tpu.memory_space<vmem>>, %arg8: memref<32x128xf32, #tpu.memory_space<vmem>>) attributes {dimension_semantics = [], scalar_prefetch = 0 : i64, scratch_operands = 0 : i64, tpu.core_type = #tpu.core_type<tc>} {
    %c0 = arith.constant 0 : index
    %c0_0 = arith.constant 0 : index
    %0 = vector.load %arg0[%c0, %c0_0] : memref<32x64xf32, #tpu.memory_space<vmem>>, vector<32x64xf32>
    %c0_1 = arith.constant 0 : index
    %c0_2 = arith.constant 0 : index
    %1 = vector.load %arg6[%c0_1, %c0_2] : memref<32x32xf32, #tpu.memory_space<vmem>>, vector<32x32xf32>
    %c0_3 = arith.constant 0 : index
    %c0_4 = arith.constant 0 : index
    %2 = vector.load %arg7[%c0_3, %c0_4] : memref<32x32xf32, #tpu.memory_space<vmem>>, vector<32x32xf32>
    %3 = arith.truncf %0 : vector<32x64xf32> to vector<32x64xbf16>
    %c0_5 = arith.constant 0 : index
    %c0_6 = arith.constant 0 : index
    %4 = vector.load %arg1[%c0_5, %c0_6] : memref<64x384xbf16, #tpu.memory_space<vmem>>, vector<64x384xbf16>
    %cst = arith.constant dense<0.000000e+00> : vector<32x384xf32>
    %5 = tpu.matmul %3, %4, %cst {dimension_numbers = #tpu.dot_dimension_numbers<[1], [0], [0], [1], [0, 0, 1, 1], [], []>} : vector<32x64xbf16>, vector<64x384xbf16>, vector<32x384xf32> -> vector<32x384xf32>
    %6 = vector.extract_strided_slice %5 {offsets = [0, 0], sizes = [32, 128], strides = [1, 1]} : vector<32x384xf32> to vector<32x128xf32>
    %7 = vector.extract_strided_slice %5 {offsets = [0, 128], sizes = [32, 128], strides = [1, 1]} : vector<32x384xf32> to vector<32x128xf32>
    %8 = vector.extract_strided_slice %5 {offsets = [0, 256], sizes = [32, 128], strides = [1, 1]} : vector<32x384xf32> to vector<32x128xf32>
    %cst_7 = arith.constant dense<0.000000e+00> : vector<32x128xf32>
    %9 = tpu.matmul %1, %6, %cst_7 {dimension_numbers = #tpu.dot_dimension_numbers<[1], [0], [0], [1], [0, 0, 1, 1], [], []>} : vector<32x32xf32>, vector<32x128xf32>, vector<32x128xf32> -> vector<32x128xf32>
    %cst_8 = arith.constant dense<0.000000e+00> : vector<32x128xf32>
    %10 = tpu.matmul %2, %8, %cst_8 {dimension_numbers = #tpu.dot_dimension_numbers<[1], [0], [0], [1], [0, 0, 1, 1], [], []>} : vector<32x32xf32>, vector<32x128xf32>, vector<32x128xf32> -> vector<32x128xf32>
    %11 = arith.addf %9, %7 : vector<32x128xf32>
    %12 = arith.addf %11, %10 : vector<32x128xf32>
    %c0_9 = arith.constant 0 : index
    %c0_10 = arith.constant 0 : index
    %13 = vector.load %arg2[%c0_9, %c0_10] : memref<1x128xf32, #tpu.memory_space<vmem>>, vector<1x128xf32>
    %14 = vector.broadcast %13 : vector<1x128xf32> to vector<32x128xf32>
    %15 = arith.addf %12, %14 : vector<32x128xf32>
    %cst_11 = arith.constant 0.000000e+00 : f32
    %16 = vector.broadcast %cst_11 : f32 to vector<32x128xf32>
    %17 = arith.cmpf ogt, %15, %16 : vector<32x128xf32>
    %cst_12 = arith.constant 0.000000e+00 : f32
    %18 = vector.broadcast %cst_12 : f32 to vector<32x128xf32>
    %19 = arith.minimumf %15, %18 : vector<32x128xf32>
    %20 = math.exp %19 : vector<32x128xf32>
    %cst_13 = arith.constant 1.000000e+00 : f32
    %21 = vector.broadcast %cst_13 : f32 to vector<32x128xf32>
    %22 = arith.subf %20, %21 : vector<32x128xf32>
    %23 = arith.select %17, %15, %22 : vector<32x128xi1>, vector<32x128xf32>
    %24 = arith.truncf %23 : vector<32x128xf32> to vector<32x128xbf16>
    %c0_14 = arith.constant 0 : index
    %c0_15 = arith.constant 0 : index
    %25 = vector.load %arg3[%c0_14, %c0_15] : memref<128x384xbf16, #tpu.memory_space<vmem>>, vector<128x384xbf16>
    %cst_16 = arith.constant dense<0.000000e+00> : vector<32x384xf32>
    %26 = tpu.matmul %24, %25, %cst_16 {dimension_numbers = #tpu.dot_dimension_numbers<[1], [0], [0], [1], [0, 0, 1, 1], [], []>} : vector<32x128xbf16>, vector<128x384xbf16>, vector<32x384xf32> -> vector<32x384xf32>
    %27 = vector.extract_strided_slice %26 {offsets = [0, 0], sizes = [32, 128], strides = [1, 1]} : vector<32x384xf32> to vector<32x128xf32>
    %28 = vector.extract_strided_slice %26 {offsets = [0, 128], sizes = [32, 128], strides = [1, 1]} : vector<32x384xf32> to vector<32x128xf32>
    %29 = vector.extract_strided_slice %26 {offsets = [0, 256], sizes = [32, 128], strides = [1, 1]} : vector<32x384xf32> to vector<32x128xf32>
    %cst_17 = arith.constant dense<0.000000e+00> : vector<32x128xf32>
    %30 = tpu.matmul %1, %27, %cst_17 {dimension_numbers = #tpu.dot_dimension_numbers<[1], [0], [0], [1], [0, 0, 1, 1], [], []>} : vector<32x32xf32>, vector<32x128xf32>, vector<32x128xf32> -> vector<32x128xf32>
    %cst_18 = arith.constant dense<0.000000e+00> : vector<32x128xf32>
    %31 = tpu.matmul %2, %29, %cst_18 {dimension_numbers = #tpu.dot_dimension_numbers<[1], [0], [0], [1], [0, 0, 1, 1], [], []>} : vector<32x32xf32>, vector<32x128xf32>, vector<32x128xf32> -> vector<32x128xf32>
    %32 = arith.addf %30, %28 : vector<32x128xf32>
    %33 = arith.addf %32, %31 : vector<32x128xf32>
    %c0_19 = arith.constant 0 : index
    %c0_20 = arith.constant 0 : index
    %34 = vector.load %arg4[%c0_19, %c0_20] : memref<1x128xf32, #tpu.memory_space<vmem>>, vector<1x128xf32>
    %35 = vector.broadcast %34 : vector<1x128xf32> to vector<32x128xf32>
    %36 = arith.addf %33, %35 : vector<32x128xf32>
    %c0_21 = arith.constant 0 : index
    %c0_22 = arith.constant 0 : index
    %37 = vector.load %arg5[%c0_21, %c0_22] : memref<64x128xf32, #tpu.memory_space<vmem>>, vector<64x128xf32>
    %cst_23 = arith.constant dense<0.000000e+00> : vector<32x128xf32>
    %38 = tpu.matmul %0, %37, %cst_23 {dimension_numbers = #tpu.dot_dimension_numbers<[1], [0], [0], [1], [0, 0, 1, 1], [], []>} : vector<32x64xf32>, vector<64x128xf32>, vector<32x128xf32> -> vector<32x128xf32>
    %39 = arith.addf %38, %36 : vector<32x128xf32>
    %cst_24 = arith.constant 0.000000e+00 : f32
    %40 = vector.broadcast %cst_24 : f32 to vector<32x128xf32>
    %41 = arith.cmpf ogt, %39, %40 : vector<32x128xf32>
    %cst_25 = arith.constant 0.000000e+00 : f32
    %42 = vector.broadcast %cst_25 : f32 to vector<32x128xf32>
    %43 = arith.minimumf %39, %42 : vector<32x128xf32>
    %44 = math.exp %43 : vector<32x128xf32>
    %cst_26 = arith.constant 1.000000e+00 : f32
    %45 = vector.broadcast %cst_26 : f32 to vector<32x128xf32>
    %46 = arith.subf %44, %45 : vector<32x128xf32>
    %47 = arith.select %41, %39, %46 : vector<32x128xi1>, vector<32x128xf32>
    %c0_27 = arith.constant 0 : index
    %c0_28 = arith.constant 0 : index
    %48 = vector.load %arg8[%c0_27, %c0_28] : memref<32x128xf32, #tpu.memory_space<vmem>>, vector<32x128xf32>
    tpu.vector_store %arg8[%c0_27, %c0_28], %47 {strides = array<i32>} : memref<32x128xf32, #tpu.memory_space<vmem>>, vector<32x128xf32>,
    return
  }
}

</mosaic_0001>

<llo_original>
// kernel: forward.1
$region0: #{forward.1}
  #allocation0 [shape = 'u32[]', space=smem, size = 0x4, offset = 0x4, fixed_abs, tag = 'smem constant byte address 0x4 - core index']
  #allocation1 [shape = 'u32[144,128]{1,0:T(1,128)}', space=vmem, size = 0x12000, scoped, tag = 'internal scratch']
  %s0 = inlined_call_operand.vmem [shape: f32[32,64], index: 0, kind: input, shape index: {}]
  %s1 = inlined_call_operand.vmem [shape: bf16[64,384], index: 1, kind: input, shape index: {}]
  %s2 = inlined_call_operand.vmem [shape: f32[1,128], index: 2, kind: input, shape index: {}]
  %s3 = inlined_call_operand.vmem [shape: bf16[128,384], index: 3, kind: input, shape index: {}]
  %s4 = inlined_call_operand.vmem [shape: f32[1,128], index: 4, kind: input, shape index: {}]
  %s5 = inlined_call_operand.vmem [shape: f32[64,128], index: 5, kind: input, shape index: {}]
  %s6 = inlined_call_operand.vmem [shape: f32[32,32], index: 6, kind: input, shape index: {}]
  %s7 = inlined_call_operand.vmem [shape: f32[32,32], index: 7, kind: input, shape index: {}]
  %s8 = inlined_call_operand.vmem [shape: f32[32,128], index: 8, kind: output, shape index: {}]
  %s9 = sld [smem:[#allocation0]]
  $region42: #{forward.1} parent=0
    _
  %s11 = ssub.s32 1, %s9
  %s12 = scalar_select 0, %s11, %s9
  // Predicated region
  $region2: #{forward.1} parent=0 // pred_check
    _
  $region3: #{forward.1} parent=0 // pred_check_branch
    %14 = sbr.rel (0) target = $region5
  $region4: #{forward.1} parent=0 // pred_region
    _
  $region5: #{forward.1} parent=0 // pred_fallthru
    _
  // Predicated region
  $region6: #{forward.1} parent=0 // pred_check
    _
  $region7: #{forward.1} parent=0 // pred_check_branch
    %16 = sbr.rel (0) target = $region9
  $region8: #{forward.1} parent=0 // pred_region
    _
  $region9: #{forward.1} parent=0 // pred_fallthru
    _
  // Predicated region
  $region10: #{forward.1} parent=0 // pred_check
    _
  $region11: #{forward.1} parent=0 // pred_check_branch
    %18 = sbr.rel (0) target = $region13
  $region12: #{forward.1} parent=0 // pred_region
    _
  $region13: #{forward.1} parent=0 // pred_fallthru
    _
  // Predicated region
  $region14: #{forward.1} parent=0 // pred_check
    _
  $region15: #{forward.1} parent=0 // pred_check_branch
    %20 = sbr.rel (0) target = $region17
  $region16: #{forward.1} parent=0 // pred_region
    _
  $region17: #{forward.1} parent=0 // pred_fallthru
    _
  // Predicated region
  $region18: #{forward.1} parent=0 // pred_check
    _
  $region19: #{forward.1} parent=0 // pred_check_branch
    %22 = sbr.rel (0) target = $region21
  $region20: #{forward.1} parent=0 // pred_region
    _
  $region21: #{forward.1} parent=0 // pred_fallthru
    _
  // Predicated region
  $region22: #{forward.1} parent=0 // pred_check
    _
  $region23: #{forward.1} parent=0 // pred_check_branch
    %24 = sbr.rel (0) target = $region25
  $region24: #{forward.1} parent=0 // pred_region
    _
  $region25: #{forward.1} parent=0 // pred_fallthru
    _
  // Predicated region
  $region26: #{forward.1} parent=0 // pred_check
    _
  $region27: #{forward.1} parent=0 // pred_check_branch
    %26 = sbr.rel (0) target = $region29
  $region28: #{forward.1} parent=0 // pred_region
    _
  $region29: #{forward.1} parent=0 // pred_fallthru
    _
  // Predicated region
  $region30: #{forward.1} parent=0 // pred_check
    _
  $region31: #{forward.1} parent=0 // pred_check_branch
    %28 = sbr.rel (0) target = $region33
  $region32: #{forward.1} parent=0 // pred_region
    _
  $region33: #{forward.1} parent=0 // pred_fallthru
    _
  %v30 = vld [vmem:[%s0] sm:$0xff]
  %v31 = vld [vmem:[%s0 + $0x8] sm:$0xff]
  %v32 = vld [vmem:[%s0 + $0x10] sm:$0xff]
  %v33 = vld [vmem:[%s0 + $0x18] sm:$0xff]
  %v34 = vld [vmem:[%s6] sm:$0xff]
  %v35 = vld [vmem:[%s6 + $0x8] sm:$0xff]
  %v36 = vld [vmem:[%s6 + $0x10] sm:$0xff]
  %v37 = vld [vmem:[%s6 + $0x18] sm:$0xff]
  %v38 = vld [vmem:[%s7] sm:$0xff]
  %v39 = vld [vmem:[%s7 + $0x8] sm:$0xff]
  %v40 = vld [vmem:[%s7 + $0x10] sm:$0xff]
  %v41 = vld [vmem:[%s7 + $0x18] sm:$0xff]
  %v42 = vpack.c.bf16 %v31, %v30
  %v43 = vpack.c.bf16 %v33, %v32
  %v44 = vld [vmem:[%s1] sm:$0xff]
  %v45 = vld [vmem:[%s1 + $0x8] sm:$0xf]
  %v46 = vld [vmem:[%s1 + $0xc] sm:$0xff]
  %v47 = vld [vmem:[%s1 + $0x14] sm:$0xf]
  %v48 = vld [vmem:[%s1 + $0x18] sm:$0xff]
  %v49 = vld [vmem:[%s1 + $0x20] sm:$0xf]
  %v50 = vld [vmem:[%s1 + $0x24] sm:$0xff]
  %v51 = vld [vmem:[%s1 + $0x2c] sm:$0xf]
  %v52 = vld [vmem:[%s1 + $0x30] sm:$0xff]
  %v53 = vld [vmem:[%s1 + $0x38] sm:$0xf]
  %v54 = vld [vmem:[%s1 + $0x3c] sm:$0xff]
  %v55 = vld [vmem:[%s1 + $0x44] sm:$0xf]
  %v56 = vld [vmem:[%s1 + $0x48] sm:$0xff]
  %v57 = vld [vmem:[%s1 + $0x50] sm:$0xf]
  %v58 = vld [vmem:[%s1 + $0x54] sm:$0xff]
  %v59 = vld [vmem:[%s1 + $0x5c] sm:$0xf]
  %v76 = vunpack.c.l.b16 %v44
  %v77 = vunpack.c.h.b16 %v44
  %v78 = vunpack.c.l.b16 %v45
  %v79 = vunpack.c.l.b16 %v46
  %v80 = vunpack.c.h.b16 %v46
  %v81 = vunpack.c.l.b16 %v47
  %v82 = vunpack.c.l.b16 %v48
  %v83 = vunpack.c.h.b16 %v48
  %v84 = vunpack.c.l.b16 %v49
  %v85 = vunpack.c.l.b16 %v50
  %v86 = vunpack.c.h.b16 %v50
  %v87 = vunpack.c.l.b16 %v51
  %v88 = vunpack.c.l.b16 %v52
  %v89 = vunpack.c.h.b16 %v52
  %v90 = vunpack.c.l.b16 %v53
  %v91 = vunpack.c.l.b16 %v54
  %v92 = vunpack.c.h.b16 %v54
  %v93 = vunpack.c.l.b16 %v55
  %v94 = vunpack.c.l.b16 %v56
  %v95 = vunpack.c.h.b16 %v56
  %v96 = vunpack.c.l.b16 %v57
  %v97 = vunpack.c.l.b16 %v58
  %v98 = vunpack.c.h.b16 %v58
  %v99 = vunpack.c.l.b16 %v59
  %v100 = vpack.c.b16 %v79, %v76
  %v101 = vpack.c.b16 %v80, %v77
  %v102 = vpack.c.b16 %v81, %v78
  %v103 = vpack.c.b16 %v85, %v82
  %v104 = vpack.c.b16 %v86, %v83
  %v105 = vpack.c.b16 %v87, %v84
  %v106 = vpack.c.b16 %v91, %v88
  %v107 = vpack.c.b16 %v92, %v89
  %v108 = vpack.c.b16 %v93, %v90
  %v109 = vpack.c.b16 %v97, %v94
  %v110 = vpack.c.b16 %v98, %v95
  %v111 = vpack.c.b16 %v99, %v96
  %vm124 = vcmask 523264
  %v126 = vsel %vm124, %v42, 0
  %v129 = vsel %vm124, %v43, 0
  %131 = vmatprep.subr.bf16.mxu0 %v101
  %132 = vmatpush1.bf16.msra.mxu0 %v100
  %133 = vmatprep.subr.bf16.mxu0 %v104
  %134 = vmatpush1.bf16.msra.mxu0 %v103
  %135 = vmatprep.subr.bf16.mxu0 %v107
  %136 = vmatpush1.bf16.msra.mxu0 %v106
  %137 = vmatprep.subr.bf16.mxu0 %v110
  %138 = vmatpush1.bf16.msra.mxu0 %v109
  %139 = vmatprep.subr.bf16.mxu0 0
  %140 = vmatpush1.bf16.msra.mxu0 0
  %141 = vmatprep.subr.bf16.mxu0 0
  %142 = vmatpush1.bf16.msra.mxu0 0
  %143 = vmatprep.subr.bf16.mxu0 0
  %144 = vmatpush1.bf16.msra.mxu0 0
  %145 = vmatprep.subr.bf16.mxu0 0
  %146 = vmatpush1.bf16.msra.mxu0 0
  %147 = vmatprep.subr.bf16.mxu0 0
  %148 = vmatpush1.bf16.msra.mxu0 0
  %149 = vmatprep.subr.bf16.mxu0 0
  %150 = vmatpush1.bf16.msra.mxu0 0
  %151 = vmatprep.subr.bf16.mxu0 0
  %152 = vmatpush1.bf16.msra.mxu0 0
  %153 = vmatprep.subr.bf16.mxu0 0
  %154 = vmatpush1.bf16.msra.mxu0 0
  %155 = vmatprep.subr.bf16.mxu0 0
  %156 = vmatpush1.bf16.msra.mxu0 0
  %157 = vmatprep.subr.bf16.mxu0 0
  %158 = vmatpush1.bf16.msra.mxu0 0
  %159 = vmatprep.subr.bf16.mxu0 0
  %160 = vmatpush1.bf16.msra.mxu0 0
  %161 = vmatprep.subr.bf16.mxu0 0
  %162 = vmatpush1.bf16.msra.mxu0 0
  %163 = vmatprep.mubr.bf16.mxu0 0
  %164 = vmatmul.mubr.bf16.gmra.mrb[0].mxu0 %v126
  %v165 = vpop.f32.mrb[0].mxu0
  %v166 = vadd.f32 0.0, %v165
  %v167 = vpop.f32.mrb[0].mxu0
  %v168 = vadd.f32 0.0, %v167
  %v169 = vpop.f32.mrb[0].mxu0
  %v170 = vadd.f32 0.0, %v169
  %v171 = vpop.f32.mrb[0].mxu0
  %v172 = vadd.f32 0.0, %v171
  %173 = vmatprep.mubr.bf16.mxu0 0
  %174 = vmatmul.mubr.bf16.gmra.mrb[0].mxu0 %v129
  %v175 = vpop.f32.mrb[0].mxu0
  %v176 = vadd.f32 0.0, %v175
  %v177 = vpop.f32.mrb[0].mxu0
  %v178 = vadd.f32 0.0, %v177
  %v179 = vpop.f32.mrb[0].mxu0
  %v180 = vadd.f32 0.0, %v179
  %v181 = vpop.f32.mrb[0].mxu0
  %v182 = vadd.f32 0.0, %v181
  %183 = vdwg.mxu0
  %184 = vmatprep.subr.bf16.mxu0 0
  %185 = vmatpush1.bf16.msra.mxu0 %v102
  %186 = vmatprep.subr.bf16.mxu0 0
  %187 = vmatpush1.bf16.msra.mxu0 %v105
  %188 = vmatprep.subr.bf16.mxu0 0
  %189 = vmatpush1.bf16.msra.mxu0 %v108
  %190 = vmatprep.subr.bf16.mxu0 0
  %191 = vmatpush1.bf16.msra.mxu0 %v111
  %192 = vmatprep.subr.bf16.mxu0 0
  %193 = vmatpush1.bf16.msra.mxu0 0
  %194 = vmatprep.subr.bf16.mxu0 0
  %195 = vmatpush1.bf16.msra.mxu0 0
  %196 = vmatprep.subr.bf16.mxu0 0
  %197 = vmatpush1.bf16.msra.mxu0 0
  %198 = vmatprep.subr.bf16.mxu0 0
  %199 = vmatpush1.bf16.msra.mxu0 0
  %200 = vmatprep.subr.bf16.mxu0 0
  %201 = vmatpush1.bf16.msra.mxu0 0
  %202 = vmatprep.subr.bf16.mxu0 0
  %203 = vmatpush1.bf16.msra.mxu0 0
  %204 = vmatprep.subr.bf16.mxu0 0
  %205 = vmatpush1.bf16.msra.mxu0 0
  %206 = vmatprep.subr.bf16.mxu0 0
  %207 = vmatpush1.bf16.msra.mxu0 0
  %208 = vmatprep.subr.bf16.mxu0 0
  %209 = vmatpush1.bf16.msra.mxu0 0
  %210 = vmatprep.subr.bf16.mxu0 0
  %211 = vmatpush1.bf16.msra.mxu0 0
  %212 = vmatprep.subr.bf16.mxu0 0
  %213 = vmatpush1.bf16.msra.mxu0 0
  %214 = vmatprep.subr.bf16.mxu0 0
  %215 = vmatpush1.bf16.msra.mxu0 0
  %216 = vmatprep.mubr.bf16.mxu0 0
  %217 = vmatmul.mubr.bf16.gmra.mrb[0].mxu0 %v126
  %v218 = vpop.f32.mrb[0].mxu0
  %v219 = vadd.f32 0.0, %v218
  %v220 = vpop.f32.mrb[0].mxu0
  %v221 = vpop.f32.mrb[0].mxu0
  %v222 = vadd.f32 0.0, %v221
  %v223 = vpop.f32.mrb[0].mxu0
  %224 = vmatprep.mubr.bf16.mxu0 0
  %225 = vmatmul.mubr.bf16.gmra.mrb[0].mxu0 %v129
  %v226 = vpop.f32.mrb[0].mxu0
  %v227 = vadd.f32 0.0, %v226
  %v228 = vpop.f32.mrb[0].mxu0
  %v229 = vpop.f32.mrb[0].mxu0
  %v230 = vadd.f32 0.0, %v229
  %v231 = vpop.f32.mrb[0].mxu0
  %232 = vdwg.mxu0
  %vm233 = vcmask 261120
  %v235 = vsel %vm233, %v38, 0
  %v238 = vsel %vm233, %v39, 0
  %v241 = vsel %vm233, %v40, 0
  %v244 = vsel %vm233, %v41, 0
  %246 = vmatprep.subr.mxu0 0.0
  %247 = vmatpush1.msra.mxu0 %v219
  %248 = vmatprep.subr.mxu0 0.0
  %249 = vmatpush1.msra.mxu0 %v222
  %250 = vmatprep.subr.mxu0 0.0
  %251 = vmatpush1.msra.mxu0 %v227
  %252 = vmatprep.subr.mxu0 0.0
  %253 = vmatpush1.msra.mxu0 %v230
  %254 = vmatprep.subr.mxu0 0.0
  %255 = vmatpush1.msra.mxu0 0.0
  %256 = vmatprep.subr.mxu0 0.0
  %257 = vmatpush1.msra.mxu0 0.0
  %258 = vmatprep.subr.mxu0 0.0
  %259 = vmatpush1.msra.mxu0 0.0
  %260 = vmatprep.subr.mxu0 0.0
  %261 = vmatpush1.msra.mxu0 0.0
  %262 = vmatprep.subr.mxu0 0.0
  %263 = vmatpush1.msra.mxu0 0.0
  %264 = vmatprep.subr.mxu0 0.0
  %265 = vmatpush1.msra.mxu0 0.0
  %266 = vmatprep.subr.mxu0 0.0
  %267 = vmatpush1.msra.mxu0 0.0
  %268 = vmatprep.subr.mxu0 0.0
  %269 = vmatpush1.msra.mxu0 0.0
  %270 = vmatprep.subr.mxu0 0.0
  %271 = vmatpush1.msra.mxu0 0.0
  %272 = vmatprep.subr.mxu0 0.0
  %273 = vmatpush1.msra.mxu0 0.0
  %274 = vmatprep.subr.mxu0 0.0
  %275 = vmatpush1.msra.mxu0 0.0
  %276 = vmatprep.subr.mxu0 0.0
  %277 = vmatpush1.msra.mxu0 0.0
  %278 = vmatprep.subr.mxu0 0.0
  %279 = vmatpush1.msra.mxu0 0.0
  %280 = vmatprep.subr.mxu0 0.0
  %281 = vmatpush1.msra.mxu0 0.0
  %282 = vmatprep.subr.mxu0 0.0
  %283 = vmatpush1.msra.mxu0 0.0
  %284 = vmatprep.subr.mxu0 0.0
  %285 = vmatpush1.msra.mxu0 0.0
  %286 = vmatprep.subr.mxu0 0.0
  %287 = vmatpush1.msra.mxu0 0.0
  %288 = vmatprep.subr.mxu0 0.0
  %289 = vmatpush1.msra.mxu0 0.0
  %290 = vmatprep.subr.mxu0 0.0
  %291 = vmatpush1.msra.mxu0 0.0
  %292 = vmatprep.subr.mxu0 0.0
  %293 = vmatpush1.msra.mxu0 0.0
  %294 = vmatprep.subr.mxu0 0.0
  %295 = vmatpush1.msra.mxu0 0.0
  %296 = vmatprep.subr.mxu0 0.0
  %297 = vmatpush1.msra.mxu0 0.0
  %298 = vmatprep.subr.mxu0 0.0
  %299 = vmatpush1.msra.mxu0 0.0
  %300 = vmatprep.subr.mxu0 0.0
  %301 = vmatpush1.msra.mxu0 0.0
  %302 = vmatprep.subr.mxu0 0.0
  %303 = vmatpush1.msra.mxu0 0.0
  %304 = vmatprep.subr.mxu0 0.0
  %305 = vmatpush1.msra.mxu0 0.0
  %306 = vmatprep.subr.mxu0 0.0
  %307 = vmatpush1.msra.mxu0 0.0
  %308 = vmatprep.subr.mxu0 0.0
  %309 = vmatpush1.msra.mxu0 0.0
  %310 = vmatprep.mubr.f32.mxu0 0.0
  %311 = vmatmul.mubr.f32.gmra.mrb[0].mxu0 %v235
  %v312 = vpop.f32.mrb[0].mxu0
  %v313 = vadd.f32 0.0, %v312
  %v314 = vpop.f32.mrb[0].mxu0
  %315 = vmatprep.mubr.f32.mxu0 0.0
  %316 = vmatmul.mubr.f32.gmra.mrb[0].mxu0 %v238
  %v317 = vpop.f32.mrb[0].mxu0
  %v318 = vadd.f32 0.0, %v317
  %v319 = vpop.f32.mrb[0].mxu0
  %320 = vmatprep.mubr.f32.mxu0 0.0
  %321 = vmatmul.mubr.f32.gmra.mrb[0].mxu0 %v241
  %v322 = vpop.f32.mrb[0].mxu0
  %v323 = vadd.f32 0.0, %v322
  %v324 = vpop.f32.mrb[0].mxu0
  %325 = vmatprep.mubr.f32.mxu0 0.0
  %326 = vmatmul.mubr.f32.gmra.mrb[0].mxu0 %v244
  %v327 = vpop.f32.mrb[0].mxu0
  %v328 = vadd.f32 0.0, %v327
  %v329 = vpop.f32.mrb[0].mxu0
  %330 = vdwg.mxu0
  %v332 = vsel %vm233, %v34, 0
  %v335 = vsel %vm233, %v35, 0
  %v338 = vsel %vm233, %v36, 0
  %v341 = vsel %vm233, %v37, 0
  %343 = vmatprep.subr.mxu0 0.0
  %344 = vmatpush1.msra.mxu0 %v166
  %345 = vmatprep.subr.mxu0 0.0
  %346 = vmatpush1.msra.mxu0 %v170
  %347 = vmatprep.subr.mxu0 0.0
  %348 = vmatpush1.msra.mxu0 %v176
  %349 = vmatprep.subr.mxu0 0.0
  %350 = vmatpush1.msra.mxu0 %v180
  %351 = vmatprep.subr.mxu0 0.0
  %352 = vmatpush1.msra.mxu0 0.0
  %353 = vmatprep.subr.mxu0 0.0
  %354 = vmatpush1.msra.mxu0 0.0
  %355 = vmatprep.subr.mxu0 0.0
  %356 = vmatpush1.msra.mxu0 0.0
  %357 = vmatprep.subr.mxu0 0.0
  %358 = vmatpush1.msra.mxu0 0.0
  %359 = vmatprep.subr.mxu0 0.0
  %360 = vmatpush1.msra.mxu0 0.0
  %361 = vmatprep.subr.mxu0 0.0
  %362 = vmatpush1.msra.mxu0 0.0
  %363 = vmatprep.subr.mxu0 0.0
  %364 = vmatpush1.msra.mxu0 0.0
  %365 = vmatprep.subr.mxu0 0.0
  %366 = vmatpush1.msra.mxu0 0.0
  %367 = vmatprep.subr.mxu0 0.0
  %368 = vmatpush1.msra.mxu0 0.0
  %369 = vmatprep.subr.mxu0 0.0
  %370 = vmatpush1.msra.mxu0 0.0
  %371 = vmatprep.subr.mxu0 0.0
  %372 = vmatpush1.msra.mxu0 0.0
  %373 = vmatprep.subr.mxu0 0.0
  %374 = vmatpush1.msra.mxu0 0.0
  %375 = vmatprep.subr.mxu0 0.0
  %376 = vmatpush1.msra.mxu0 0.0
  %377 = vmatprep.subr.mxu0 0.0
  %378 = vmatpush1.msra.mxu0 0.0
  %379 = vmatprep.subr.mxu0 0.0
  %380 = vmatpush1.msra.mxu0 0.0
  %381 = vmatprep.subr.mxu0 0.0
  %382 = vmatpush1.msra.mxu0 0.0
  %383 = vmatprep.subr.mxu0 0.0
  %384 = vmatpush1.msra.mxu0 0.0
  %385 = vmatprep.subr.mxu0 0.0
  %386 = vmatpush1.msra.mxu0 0.0
  %387 = vmatprep.subr.mxu0 0.0
  %388 = vmatpush1.msra.mxu0 0.0
  %389 = vmatprep.subr.mxu0 0.0
  %390 = vmatpush1.msra.mxu0 0.0
  %391 = vmatprep.subr.mxu0 0.0
  %392 = vmatpush1.msra.mxu0 0.0
  %393 = vmatprep.subr.mxu0 0.0
  %394 = vmatpush1.msra.mxu0 0.0
  %395 = vmatprep.subr.mxu0 0.0
  %396 = vmatpush1.msra.mxu0 0.0
  %397 = vmatprep.subr.mxu0 0.0
  %398 = vmatpush1.msra.mxu0 0.0
  %399 = vmatprep.subr.mxu0 0.0
  %400 = vmatpush1.msra.mxu0 0.0
  %401 = vmatprep.subr.mxu0 0.0
  %402 = vmatpush1.msra.mxu0 0.0
  %403 = vmatprep.subr.mxu0 0.0
  %404 = vmatpush1.msra.mxu0 0.0
  %405 = vmatprep.subr.mxu0 0.0
  %406 = vmatpush1.msra.mxu0 0.0
  %407 = vmatprep.mubr.f32.mxu0 0.0
  %408 = vmatmul.mubr.f32.gmra.mrb[0].mxu0 %v332
  %v409 = vpop.f32.mrb[0].mxu0
  %v410 = vadd.f32 %v168, %v409
  %v411 = vpop.f32.mrb[0].mxu0
  %412 = vmatprep.mubr.f32.mxu0 0.0
  %413 = vmatmul.mubr.f32.gmra.mrb[0].mxu0 %v335
  %v414 = vpop.f32.mrb[0].mxu0
  %v415 = vadd.f32 %v172, %v414
  %v416 = vpop.f32.mrb[0].mxu0
  %417 = vmatprep.mubr.f32.mxu0 0.0
  %418 = vmatmul.mubr.f32.gmra.mrb[0].mxu0 %v338
  %v419 = vpop.f32.mrb[0].mxu0
  %v420 = vadd.f32 %v178, %v419
  %v421 = vpop.f32.mrb[0].mxu0
  %422 = vmatprep.mubr.f32.mxu0 0.0
  %423 = vmatmul.mubr.f32.gmra.mrb[0].mxu0 %v341
  %v424 = vpop.f32.mrb[0].mxu0
  %v425 = vadd.f32 %v182, %v424
  %v426 = vpop.f32.mrb[0].mxu0
  %427 = vdwg.mxu0
  %v428 = vadd.f32 %v410, %v313
  %v429 = vadd.f32 %v415, %v318
  %v430 = vadd.f32 %v420, %v323
  %v431 = vadd.f32 %v425, %v328
  %v432 = vld [vmem:[%s2] sm:$0x1]
  %v434 = vlaneseq
  %v435 = vshrl.u32 %v434, 7
  %v436 = vsub.s32 0, %v435
  %v437 = vrot.slane %v432, %v436
  %v439 = vadd.f32 %v428, %v437
  %v440 = vadd.f32 %v429, %v437
  %v441 = vadd.f32 %v430, %v437
  %v442 = vadd.f32 %v431, %v437
  %vm443 = vcmp.gt.f32.partialorder %v439, 0.0
  %vm444 = vcmp.gt.f32.partialorder %v440, 0.0
  %vm445 = vcmp.gt.f32.partialorder %v441, 0.0
  %vm446 = vcmp.gt.f32.partialorder %v442, 0.0
  %v447 = vmin.f32 %v439, 0.0
  %v448 = vmin.f32 %v440, 0.0
  %v449 = vmin.f32 %v441, 0.0
  %v450 = vmin.f32 %v442, 0.0
  %v451 = vmul.f32 %v447, 1.442695
  %v452 = vpow.pop %v451
  %v453 = vmul.f32 %v448, 1.442695
  %v454 = vpow.pop %v453
  %v455 = vmul.f32 %v449, 1.442695
  %v456 = vpow.pop %v455
  %v457 = vmul.f32 %v450, 1.442695
  %v458 = vpow.pop %v457
  %v459 = vsub.f32 %v452, 1.0
  %v460 = vsub.f32 %v454, 1.0
  %v461 = vsub.f32 %v456, 1.0
  %v462 = vsub.f32 %v458, 1.0
  %v463 = vsel %vm443, %v439, %v459
  %v464 = vsel %vm444, %v440, %v460
  %v465 = vsel %vm445, %v441, %v461
  %v466 = vsel %vm446, %v442, %v462
  %v467 = vpack.c.bf16 %v464, %v463
  %v468 = vpack.c.bf16 %v466, %v465
  %v469 = vld [vmem:[%s3] sm:$0xff]
  %v470 = vld [vmem:[%s3 + $0x8] sm:$0xf]
  %v471 = vld [vmem:[%s3 + $0xc] sm:$0xff]
  %v472 = vld [vmem:[%s3 + $0x14] sm:$0xf]
  %v473 = vld [vmem:[%s3 + $0x18] sm:$0xff]
  %v474 = vld [vmem:[%s3 + $0x20] sm:$0xf]
  %v475 = vld [vmem:[%s3 + $0x24] sm:$0xff]
  %v476 = vld [vmem:[%s3 + $0x2c] sm:$0xf]
  %v477 = vld [vmem:[%s3 + $0x30] sm:$0xff]
  %v478 = vld [vmem:[%s3 + $0x38] sm:$0xf]
  %v479 = vld [vmem:[%s3 + $0x3c] sm:$0xff]
  %v480 = vld [vmem:[%s3 + $0x44] sm:$0xf]
  %v481 = vld [vmem:[%s3 + $0x48] sm:$0xff]
  %v482 = vld [vmem:[%s3 + $0x50] sm:$0xf]
  %v483 = vld [vmem:[%s3 + $0x54] sm:$0xff]
  %v484 = vld [vmem:[%s3 + $0x5c] sm:$0xf]
  %v485 = vld [vmem:[%s3 + $0x60] sm:$0xff]
  %v486 = vld [vmem:[%s3 + $0x68] sm:$0xf]
  %v487 = vld [vmem:[%s3 + $0x6c] sm:$0xff]
  %v488 = vld [vmem:[%s3 + $0x74] sm:$0xf]
  %v489 = vld [vmem:[%s3 + $0x78] sm:$0xff]
  %v490 = vld [vmem:[%s3 + $0x80] sm:$0xf]
  %v491 = vld [vmem:[%s3 + $0x84] sm:$0xff]
  %v492 = vld [vmem:[%s3 + $0x8c] sm:$0xf]
  %v493 = vld [vmem:[%s3 + $0x90] sm:$0xff]
  %v494 = vld [vmem:[%s3 + $0x98] sm:$0xf]
  %v495 = vld [vmem:[%s3 + $0x9c] sm:$0xff]
  %v496 = vld [vmem:[%s3 + $0xa4] sm:$0xf]
  %v497 = vld [vmem:[%s3 + $0xa8] sm:$0xff]
  %v498 = vld [vmem:[%s3 + $0xb0] sm:$0xf]
  %v499 = vld [vmem:[%s3 + $0xb4] sm:$0xff]
  %v500 = vld [vmem:[%s3 + $0xbc] sm:$0xf]
  %v533 = vunpack.c.l.b16 %v469
  %v534 = vunpack.c.h.b16 %v469
  %v535 = vunpack.c.l.b16 %v470
  %v536 = vunpack.c.l.b16 %v471
  %v537 = vunpack.c.h.b16 %v471
  %v538 = vunpack.c.l.b16 %v472
  %v539 = vunpack.c.l.b16 %v473
  %v540 = vunpack.c.h.b16 %v473
  %v541 = vunpack.c.l.b16 %v474
  %v542 = vunpack.c.l.b16 %v475
  %v543 = vunpack.c.h.b16 %v475
  %v544 = vunpack.c.l.b16 %v476
  %v545 = vunpack.c.l.b16 %v477
  %v546 = vunpack.c.h.b16 %v477
  %v547 = vunpack.c.l.b16 %v478
  %v548 = vunpack.c.l.b16 %v479
  %v549 = vunpack.c.h.b16 %v479
  %v550 = vunpack.c.l.b16 %v480
  %v551 = vunpack.c.l.b16 %v481
  %v552 = vunpack.c.h.b16 %v481
  %v553 = vunpack.c.l.b16 %v482
  %v554 = vunpack.c.l.b16 %v483
  %v555 = vunpack.c.h.b16 %v483
  %v556 = vunpack.c.l.b16 %v484
  %v557 = vunpack.c.l.b16 %v485
  %v558 = vunpack.c.h.b16 %v485
  %v559 = vunpack.c.l.b16 %v486
  %v560 = vunpack.c.l.b16 %v487
  %v561 = vunpack.c.h.b16 %v487
  %v562 = vunpack.c.l.b16 %v488
  %v563 = vunpack.c.l.b16 %v489
  %v564 = vunpack.c.h.b16 %v489
  %v565 = vunpack.c.l.b16 %v490
  %v566 = vunpack.c.l.b16 %v491
  %v567 = vunpack.c.h.b16 %v491
  %v568 = vunpack.c.l.b16 %v492
  %v569 = vunpack.c.l.b16 %v493
  %v570 = vunpack.c.h.b16 %v493
  %v571 = vunpack.c.l.b16 %v494
  %v572 = vunpack.c.l.b16 %v495
  %v573 = vunpack.c.h.b16 %v495
  %v574 = vunpack.c.l.b16 %v496
  %v575 = vunpack.c.l.b16 %v497
  %v576 = vunpack.c.h.b16 %v497
  %v577 = vunpack.c.l.b16 %v498
  %v578 = vunpack.c.l.b16 %v499
  %v579 = vunpack.c.h.b16 %v499
  %v580 = vunpack.c.l.b16 %v500
  %v581 = vpack.c.b16 %v536, %v533
  %v582 = vpack.c.b16 %v537, %v534
  %v583 = vpack.c.b16 %v538, %v535
  %v584 = vpack.c.b16 %v542, %v539
  %v585 = vpack.c.b16 %v543, %v540
  %v586 = vpack.c.b16 %v544, %v541
  %v587 = vpack.c.b16 %v548, %v545
  %v588 = vpack.c.b16 %v549, %v546
  %v589 = vpack.c.b16 %v550, %v547
  %v590 = vpack.c.b16 %v554, %v551
  %v591 = vpack.c.b16 %v555, %v552
  %v592 = vpack.c.b16 %v556, %v553
  %v593 = vpack.c.b16 %v560, %v557
  %v594 = vpack.c.b16 %v561, %v558
  %v595 = vpack.c.b16 %v562, %v559
  %v596 = vpack.c.b16 %v566, %v563
  %v597 = vpack.c.b16 %v567, %v564
  %v598 = vpack.c.b16 %v568, %v565
  %v599 = vpack.c.b16 %v572, %v569
  %v600 = vpack.c.b16 %v573, %v570
  %v601 = vpack.c.b16 %v574, %v571
  %v602 = vpack.c.b16 %v578, %v575
  %v603 = vpack.c.b16 %v579, %v576
  %v604 = vpack.c.b16 %v580, %v577
  %629 = vmatprep.subr.bf16.mxu0 %v582
  %630 = vmatpush1.bf16.msra.mxu0 %v581
  %631 = vmatprep.subr.bf16.mxu0 %v585
  %632 = vmatpush1.bf16.msra.mxu0 %v584
  %633 = vmatprep.subr.bf16.mxu0 %v588
  %634 = vmatpush1.bf16.msra.mxu0 %v587
  %635 = vmatprep.subr.bf16.mxu0 %v591
  %636 = vmatpush1.bf16.msra.mxu0 %v590
  %637 = vmatprep.subr.bf16.mxu0 %v594
  %638 = vmatpush1.bf16.msra.mxu0 %v593
  %639 = vmatprep.subr.bf16.mxu0 %v597
  %640 = vmatpush1.bf16.msra.mxu0 %v596
  %641 = vmatprep.subr.bf16.mxu0 %v600
  %642 = vmatpush1.bf16.msra.mxu0 %v599
  %643 = vmatprep.subr.bf16.mxu0 %v603
  %644 = vmatpush1.bf16.msra.mxu0 %v602
  %645 = vmatprep.subr.bf16.mxu0 0
  %646 = vmatpush1.bf16.msra.mxu0 0
  %647 = vmatprep.subr.bf16.mxu0 0
  %648 = vmatpush1.bf16.msra.mxu0 0
  %649 = vmatprep.subr.bf16.mxu0 0
  %650 = vmatpush1.bf16.msra.mxu0 0
  %651 = vmatprep.subr.bf16.mxu0 0
  %652 = vmatpush1.bf16.msra.mxu0 0
  %653 = vmatprep.subr.bf16.mxu0 0
  %654 = vmatpush1.bf16.msra.mxu0 0
  %655 = vmatprep.subr.bf16.mxu0 0
  %656 = vmatpush1.bf16.msra.mxu0 0
  %657 = vmatprep.subr.bf16.mxu0 0
  %658 = vmatpush1.bf16.msra.mxu0 0
  %659 = vmatprep.subr.bf16.mxu0 0
  %660 = vmatpush1.bf16.msra.mxu0 0
  %661 = vmatprep.mubr.bf16.mxu0 0
  %662 = vmatmul.mubr.bf16.gmra.mrb[0].mxu0 %v467
  %v663 = vpop.f32.mrb[0].mxu0
  %v664 = vadd.f32 0.0, %v663
  %v665 = vpop.f32.mrb[0].mxu0
  %v666 = vadd.f32 0.0, %v665
  %v667 = vpop.f32.mrb[0].mxu0
  %v668 = vadd.f32 0.0, %v667
  %v669 = vpop.f32.mrb[0].mxu0
  %v670 = vadd.f32 0.0, %v669
  %671 = vmatprep.mubr.bf16.mxu0 0
  %672 = vmatmul.mubr.bf16.gmra.mrb[0].mxu0 %v468
  %v673 = vpop.f32.mrb[0].mxu0
  %v674 = vadd.f32 0.0, %v673
  %v675 = vpop.f32.mrb[0].mxu0
  %v676 = vadd.f32 0.0, %v675
  %v677 = vpop.f32.mrb[0].mxu0
  %v678 = vadd.f32 0.0, %v677
  %v679 = vpop.f32.mrb[0].mxu0
  %v680 = vadd.f32 0.0, %v679
  %681 = vdwg.mxu0
  %682 = vmatprep.subr.bf16.mxu0 0
  %683 = vmatpush1.bf16.msra.mxu0 %v583
  %684 = vmatprep.subr.bf16.mxu0 0
  %685 = vmatpush1.bf16.msra.mxu0 %v586
  %686 = vmatprep.subr.bf16.mxu0 0
  %687 = vmatpush1.bf16.msra.mxu0 %v589
  %688 = vmatprep.subr.bf16.mxu0 0
  %689 = vmatpush1.bf16.msra.mxu0 %v592
  %690 = vmatprep.subr.bf16.mxu0 0
  %691 = vmatpush1.bf16.msra.mxu0 %v595
  %692 = vmatprep.subr.bf16.mxu0 0
  %693 = vmatpush1.bf16.msra.mxu0 %v598
  %694 = vmatprep.subr.bf16.mxu0 0
  %695 = vmatpush1.bf16.msra.mxu0 %v601
  %696 = vmatprep.subr.bf16.mxu0 0
  %697 = vmatpush1.bf16.msra.mxu0 %v604
  %698 = vmatprep.subr.bf16.mxu0 0
  %699 = vmatpush1.bf16.msra.mxu0 0
  %700 = vmatprep.subr.bf16.mxu0 0
  %701 = vmatpush1.bf16.msra.mxu0 0
  %702 = vmatprep.subr.bf16.mxu0 0
  %703 = vmatpush1.bf16.msra.mxu0 0
  %704 = vmatprep.subr.bf16.mxu0 0
  %705 = vmatpush1.bf16.msra.mxu0 0
  %706 = vmatprep.subr.bf16.mxu0 0
  %707 = vmatpush1.bf16.msra.mxu0 0
  %708 = vmatprep.subr.bf16.mxu0 0
  %709 = vmatpush1.bf16.msra.mxu0 0
  %710 = vmatprep.subr.bf16.mxu0 0
  %711 = vmatpush1.bf16.msra.mxu0 0
  %712 = vmatprep.subr.bf16.mxu0 0
  %713 = vmatpush1.bf16.msra.mxu0 0
  %714 = vmatprep.mubr.bf16.mxu0 0
  %715 = vmatmul.mubr.bf16.gmra.mrb[0].mxu0 %v467
  %v716 = vpop.f32.mrb[0].mxu0
  %v717 = vadd.f32 0.0, %v716
  %v718 = vpop.f32.mrb[0].mxu0
  %v719 = vpop.f32.mrb[0].mxu0
  %v720 = vadd.f32 0.0, %v719
  %v721 = vpop.f32.mrb[0].mxu0
  %722 = vmatprep.mubr.bf16.mxu0 0
  %723 = vmatmul.mubr.bf16.gmra.mrb[0].mxu0 %v468
  %v724 = vpop.f32.mrb[0].mxu0
  %v725 = vadd.f32 0.0, %v724
  %v726 = vpop.f32.mrb[0].mxu0
  %v727 = vpop.f32.mrb[0].mxu0
  %v728 = vadd.f32 0.0, %v727
  %v729 = vpop.f32.mrb[0].mxu0
  %730 = vdwg.mxu0
  %731 = vmatprep.subr.mxu0 0.0
  %732 = vmatpush1.msra.mxu0 %v717
  %733 = vmatprep.subr.mxu0 0.0
  %734 = vmatpush1.msra.mxu0 %v720
  %735 = vmatprep.subr.mxu0 0.0
  %736 = vmatpush1.msra.mxu0 %v725
  %737 = vmatprep.subr.mxu0 0.0
  %738 = vmatpush1.msra.mxu0 %v728
  %739 = vmatprep.subr.mxu0 0.0
  %740 = vmatpush1.msra.mxu0 0.0
  %741 = vmatprep.subr.mxu0 0.0
  %742 = vmatpush1.msra.mxu0 0.0
  %743 = vmatprep.subr.mxu0 0.0
  %744 = vmatpush1.msra.mxu0 0.0
  %745 = vmatprep.subr.mxu0 0.0
  %746 = vmatpush1.msra.mxu0 0.0
  %747 = vmatprep.subr.mxu0 0.0
  %748 = vmatpush1.msra.mxu0 0.0
  %749 = vmatprep.subr.mxu0 0.0
  %750 = vmatpush1.msra.mxu0 0.0
  %751 = vmatprep.subr.mxu0 0.0
  %752 = vmatpush1.msra.mxu0 0.0
  %753 = vmatprep.subr.mxu0 0.0
  %754 = vmatpush1.msra.mxu0 0.0
  %755 = vmatprep.subr.mxu0 0.0
  %756 = vmatpush1.msra.mxu0 0.0
  %757 = vmatprep.subr.mxu0 0.0
  %758 = vmatpush1.msra.mxu0 0.0
  %759 = vmatprep.subr.mxu0 0.0
  %760 = vmatpush1.msra.mxu0 0.0
  %761 = vmatprep.subr.mxu0 0.0
  %762 = vmatpush1.msra.mxu0 0.0
  %763 = vmatprep.subr.mxu0 0.0
  %764 = vmatpush1.msra.mxu0 0.0
  %765 = vmatprep.subr.mxu0 0.0
  %766 = vmatpush1.msra.mxu0 0.0
  %767 = vmatprep.subr.mxu0 0.0
  %768 = vmatpush1.msra.mxu0 0.0
  %769 = vmatprep.subr.mxu0 0.0
  %770 = vmatpush1.msra.mxu0 0.0
  %771 = vmatprep.subr.mxu0 0.0
  %772 = vmatpush1.msra.mxu0 0.0
  %773 = vmatprep.subr.mxu0 0.0
  %774 = vmatpush1.msra.mxu0 0.0
  %775 = vmatprep.subr.mxu0 0.0
  %776 = vmatpush1.msra.mxu0 0.0
  %777 = vmatprep.subr.mxu0 0.0
  %778 = vmatpush1.msra.mxu0 0.0
  %779 = vmatprep.subr.mxu0 0.0
  %780 = vmatpush1.msra.mxu0 0.0
  %781 = vmatprep.subr.mxu0 0.0
  %782 = vmatpush1.msra.mxu0 0.0
  %783 = vmatprep.subr.mxu0 0.0
  %784 = vmatpush1.msra.mxu0 0.0
  %785 = vmatprep.subr.mxu0 0.0
  %786 = vmatpush1.msra.mxu0 0.0
  %787 = vmatprep.subr.mxu0 0.0
  %788 = vmatpush1.msra.mxu0 0.0
  %789 = vmatprep.subr.mxu0 0.0
  %790 = vmatpush1.msra.mxu0 0.0
  %791 = vmatprep.subr.mxu0 0.0
  %792 = vmatpush1.msra.mxu0 0.0
  %793 = vmatprep.subr.mxu0 0.0
  %794 = vmatpush1.msra.mxu0 0.0
  %795 = vmatprep.mubr.f32.mxu0 0.0
  %796 = vmatmul.mubr.f32.gmra.mrb[0].mxu0 %v235
  %v797 = vpop.f32.mrb[0].mxu0
  %v798 = vadd.f32 0.0, %v797
  %v799 = vpop.f32.mrb[0].mxu0
  %800 = vmatprep.mubr.f32.mxu0 0.0
  %801 = vmatmul.mubr.f32.gmra.mrb[0].mxu0 %v238
  %v802 = vpop.f32.mrb[0].mxu0
  %v803 = vadd.f32 0.0, %v802
  %v804 = vpop.f32.mrb[0].mxu0
  %805 = vmatprep.mubr.f32.mxu0 0.0
  %806 = vmatmul.mubr.f32.gmra.mrb[0].mxu0 %v241
  %v807 = vpop.f32.mrb[0].mxu0
  %v808 = vadd.f32 0.0, %v807
  %v809 = vpop.f32.mrb[0].mxu0
  %810 = vmatprep.mubr.f32.mxu0 0.0
  %811 = vmatmul.mubr.f32.gmra.mrb[0].mxu0 %v244
  %v812 = vpop.f32.mrb[0].mxu0
  %v813 = vadd.f32 0.0, %v812
  %v814 = vpop.f32.mrb[0].mxu0
  %815 = vdwg.mxu0
  %816 = vmatprep.subr.mxu0 0.0
  %817 = vmatpush1.msra.mxu0 %v664
  %818 = vmatprep.subr.mxu0 0.0
  %819 = vmatpush1.msra.mxu0 %v668
  %820 = vmatprep.subr.mxu0 0.0
  %821 = vmatpush1.msra.mxu0 %v674
  %822 = vmatprep.subr.mxu0 0.0
  %823 = vmatpush1.msra.mxu0 %v678
  %824 = vmatprep.subr.mxu0 0.0
  %825 = vmatpush1.msra.mxu0 0.0
  %826 = vmatprep.subr.mxu0 0.0
  %827 = vmatpush1.msra.mxu0 0.0
  %828 = vmatprep.subr.mxu0 0.0
  %829 = vmatpush1.msra.mxu0 0.0
  %830 = vmatprep.subr.mxu0 0.0
  %831 = vmatpush1.msra.mxu0 0.0
  %832 = vmatprep.subr.mxu0 0.0
  %833 = vmatpush1.msra.mxu0 0.0
  %834 = vmatprep.subr.mxu0 0.0
  %835 = vmatpush1.msra.mxu0 0.0
  %836 = vmatprep.subr.mxu0 0.0
  %837 = vmatpush1.msra.mxu0 0.0
  %838 = vmatprep.subr.mxu0 0.0
  %839 = vmatpush1.msra.mxu0 0.0
  %840 = vmatprep.subr.mxu0 0.0
  %841 = vmatpush1.msra.mxu0 0.0
  %842 = vmatprep.subr.mxu0 0.0
  %843 = vmatpush1.msra.mxu0 0.0
  %844 = vmatprep.subr.mxu0 0.0
  %845 = vmatpush1.msra.mxu0 0.0
  %846 = vmatprep.subr.mxu0 0.0
  %847 = vmatpush1.msra.mxu0 0.0
  %848 = vmatprep.subr.mxu0 0.0
  %849 = vmatpush1.msra.mxu0 0.0
  %850 = vmatprep.subr.mxu0 0.0
  %851 = vmatpush1.msra.mxu0 0.0
  %852 = vmatprep.subr.mxu0 0.0
  %853 = vmatpush1.msra.mxu0 0.0
  %854 = vmatprep.subr.mxu0 0.0
  %855 = vmatpush1.msra.mxu0 0.0
  %856 = vmatprep.subr.mxu0 0.0
  %857 = vmatpush1.msra.mxu0 0.0
  %858 = vmatprep.subr.mxu0 0.0
  %859 = vmatpush1.msra.mxu0 0.0
  %860 = vmatprep.subr.mxu0 0.0
  %861 = vmatpush1.msra.mxu0 0.0
  %862 = vmatprep.subr.mxu0 0.0
  %863 = vmatpush1.msra.mxu0 0.0
  %864 = vmatprep.subr.mxu0 0.0
  %865 = vmatpush1.msra.mxu0 0.0
  %866 = vmatprep.subr.mxu0 0.0
  %867 = vmatpush1.msra.mxu0 0.0
  %868 = vmatprep.subr.mxu0 0.0
  %869 = vmatpush1.msra.mxu0 0.0
  %870 = vmatprep.subr.mxu0 0.0
  %871 = vmatpush1.msra.mxu0 0.0
  %872 = vmatprep.subr.mxu0 0.0
  %873 = vmatpush1.msra.mxu0 0.0
  %874 = vmatprep.subr.mxu0 0.0
  %875 = vmatpush1.msra.mxu0 0.0
  %876 = vmatprep.subr.mxu0 0.0
  %877 = vmatpush1.msra.mxu0 0.0
  %878 = vmatprep.subr.mxu0 0.0
  %879 = vmatpush1.msra.mxu0 0.0
  %880 = vmatprep.mubr.f32.mxu0 0.0
  %881 = vmatmul.mubr.f32.gmra.mrb[0].mxu0 %v332
  %v882 = vpop.f32.mrb[0].mxu0
  %v883 = vadd.f32 %v666, %v882
  %v884 = vpop.f32.mrb[0].mxu0
  %885 = vmatprep.mubr.f32.mxu0 0.0
  %886 = vmatmul.mubr.f32.gmra.mrb[0].mxu0 %v335
  %v887 = vpop.f32.mrb[0].mxu0
  %v888 = vadd.f32 %v670, %v887
  %v889 = vpop.f32.mrb[0].mxu0
  %890 = vmatprep.mubr.f32.mxu0 0.0
  %891 = vmatmul.mubr.f32.gmra.mrb[0].mxu0 %v338
  %v892 = vpop.f32.mrb[0].mxu0
  %v893 = vadd.f32 %v676, %v892
  %v894 = vpop.f32.mrb[0].mxu0
  %895 = vmatprep.mubr.f32.mxu0 0.0
  %896 = vmatmul.mubr.f32.gmra.mrb[0].mxu0 %v341
  %v897 = vpop.f32.mrb[0].mxu0
  %v898 = vadd.f32 %v680, %v897
  %v899 = vpop.f32.mrb[0].mxu0
  %900 = vdwg.mxu0
  %v901 = vadd.f32 %v883, %v798
  %v902 = vadd.f32 %v888, %v803
  %v903 = vadd.f32 %v893, %v808
  %v904 = vadd.f32 %v898, %v813
  %v905 = vld [vmem:[%s4] sm:$0x1]
  %v907 = vlaneseq
  %v908 = vshrl.u32 %v907, 7
  %v909 = vsub.s32 0, %v908
  %v910 = vrot.slane %v905, %v909
  %v912 = vadd.f32 %v901, %v910
  %v913 = vadd.f32 %v902, %v910
  %v914 = vadd.f32 %v903, %v910
  %v915 = vadd.f32 %v904, %v910
  %v916 = vld [vmem:[%s5] sm:$0xff]
  %v917 = vld [vmem:[%s5 + $0x8] sm:$0xff]
  %v918 = vld [vmem:[%s5 + $0x10] sm:$0xff]
  %v919 = vld [vmem:[%s5 + $0x18] sm:$0xff]
  %v920 = vld [vmem:[%s5 + $0x20] sm:$0xff]
  %v921 = vld [vmem:[%s5 + $0x28] sm:$0xff]
  %v922 = vld [vmem:[%s5 + $0x30] sm:$0xff]
  %v923 = vld [vmem:[%s5 + $0x38] sm:$0xff]
  %v925 = vsel %vm124, %v30, 0
  %v928 = vsel %vm124, %v31, 0
  %v931 = vsel %vm124, %v32, 0
  %v934 = vsel %vm124, %v33, 0
  %936 = vmatprep.subr.mxu0 0.0
  %937 = vmatpush1.msra.mxu0 %v916
  %938 = vmatprep.subr.mxu0 0.0
  %939 = vmatpush1.msra.mxu0 %v917
  %940 = vmatprep.subr.mxu0 0.0
  %941 = vmatpush1.msra.mxu0 %v918
  %942 = vmatprep.subr.mxu0 0.0
  %943 = vmatpush1.msra.mxu0 %v919
  %944 = vmatprep.subr.mxu0 0.0
  %945 = vmatpush1.msra.mxu0 %v920
  %946 = vmatprep.subr.mxu0 0.0
  %947 = vmatpush1.msra.mxu0 %v921
  %948 = vmatprep.subr.mxu0 0.0
  %949 = vmatpush1.msra.mxu0 %v922
  %950 = vmatprep.subr.mxu0 0.0
  %951 = vmatpush1.msra.mxu0 %v923
  %952 = vmatprep.subr.mxu0 0.0
  %953 = vmatpush1.msra.mxu0 0.0
  %954 = vmatprep.subr.mxu0 0.0
  %955 = vmatpush1.msra.mxu0 0.0
  %956 = vmatprep.subr.mxu0 0.0
  %957 = vmatpush1.msra.mxu0 0.0
  %958 = vmatprep.subr.mxu0 0.0
  %959 = vmatpush1.msra.mxu0 0.0
  %960 = vmatprep.subr.mxu0 0.0
  %961 = vmatpush1.msra.mxu0 0.0
  %962 = vmatprep.subr.mxu0 0.0
  %963 = vmatpush1.msra.mxu0 0.0
  %964 = vmatprep.subr.mxu0 0.0
  %965 = vmatpush1.msra.mxu0 0.0
  %966 = vmatprep.subr.mxu0 0.0
  %967 = vmatpush1.msra.mxu0 0.0
  %968 = vmatprep.subr.mxu0 0.0
  %969 = vmatpush1.msra.mxu0 0.0
  %970 = vmatprep.subr.mxu0 0.0
  %971 = vmatpush1.msra.mxu0 0.0
  %972 = vmatprep.subr.mxu0 0.0
  %973 = vmatpush1.msra.mxu0 0.0
  %974 = vmatprep.subr.mxu0 0.0
  %975 = vmatpush1.msra.mxu0 0.0
  %976 = vmatprep.subr.mxu0 0.0
  %977 = vmatpush1.msra.mxu0 0.0
  %978 = vmatprep.subr.mxu0 0.0
  %979 = vmatpush1.msra.mxu0 0.0
  %980 = vmatprep.subr.mxu0 0.0
  %981 = vmatpush1.msra.mxu0 0.0
  %982 = vmatprep.subr.mxu0 0.0
  %983 = vmatpush1.msra.mxu0 0.0
  %984 = vmatprep.subr.mxu0 0.0
  %985 = vmatpush1.msra.mxu0 0.0
  %986 = vmatprep.subr.mxu0 0.0
  %987 = vmatpush1.msra.mxu0 0.0
  %988 = vmatprep.subr.mxu0 0.0
  %989 = vmatpush1.msra.mxu0 0.0
  %990 = vmatprep.subr.mxu0 0.0
  %991 = vmatpush1.msra.mxu0 0.0
  %992 = vmatprep.subr.mxu0 0.0
  %993 = vmatpush1.msra.mxu0 0.0
  %994 = vmatprep.subr.mxu0 0.0
  %995 = vmatpush1.msra.mxu0 0.0
  %996 = vmatprep.subr.mxu0 0.0
  %997 = vmatpush1.msra.mxu0 0.0
  %998 = vmatprep.subr.mxu0 0.0
  %999 = vmatpush1.msra.mxu0 0.0
  %1000 = vmatprep.mubr.f32.mxu0 0.0
  %1001 = vmatmul.mubr.f32.gmra.mrb[0].mxu0 %v925
  %v1002 = vpop.f32.mrb[0].mxu0
  %v1003 = vadd.f32 %v912, %v1002
  %v1004 = vpop.f32.mrb[0].mxu0
  %1005 = vmatprep.mubr.f32.mxu0 0.0
  %1006 = vmatmul.mubr.f32.gmra.mrb[0].mxu0 %v928
  %v1007 = vpop.f32.mrb[0].mxu0
  %v1008 = vadd.f32 %v913, %v1007
  %v1009 = vpop.f32.mrb[0].mxu0
  %1010 = vmatprep.mubr.f32.mxu0 0.0
  %1011 = vmatmul.mubr.f32.gmra.mrb[0].mxu0 %v931
  %v1012 = vpop.f32.mrb[0].mxu0
  %v1013 = vadd.f32 %v914, %v1012
  %v1014 = vpop.f32.mrb[0].mxu0
  %1015 = vmatprep.mubr.f32.mxu0 0.0
  %1016 = vmatmul.mubr.f32.gmra.mrb[0].mxu0 %v934
  %v1017 = vpop.f32.mrb[0].mxu0
  %v1018 = vadd.f32 %v915, %v1017
  %v1019 = vpop.f32.mrb[0].mxu0
  %1020 = vdwg.mxu0
  %vm1021 = vcmp.gt.f32.partialorder %v1003, 0.0
  %vm1022 = vcmp.gt.f32.partialorder %v1008, 0.0
  %vm1023 = vcmp.gt.f32.partialorder %v1013, 0.0
  %vm1024 = vcmp.gt.f32.partialorder %v1018, 0.0
  %v1025 = vmin.f32 %v1003, 0.0
  %v1026 = vmin.f32 %v1008, 0.0
  %v1027 = vmin.f32 %v1013, 0.0
  %v1028 = vmin.f32 %v1018, 0.0
  %v1029 = vmul.f32 %v1025, 1.442695
  %v1030 = vpow.pop %v1029
  %v1031 = vmul.f32 %v1026, 1.442695
  %v1032 = vpow.pop %v1031
  %v1033 = vmul.f32 %v1027, 1.442695
  %v1034 = vpow.pop %v1033
  %v1035 = vmul.f32 %v1028, 1.442695
  %v1036 = vpow.pop %v1035
  %v1037 = vsub.f32 %v1030, 1.0
  %v1038 = vsub.f32 %v1032, 1.0
  %v1039 = vsub.f32 %v1034, 1.0
  %v1040 = vsub.f32 %v1036, 1.0
  %v1041 = vsel %vm1021, %v1003, %v1037
  %v1042 = vsel %vm1022, %v1008, %v1038
  %v1043 = vsel %vm1023, %v1013, %v1039
  %v1044 = vsel %vm1024, %v1018, %v1040
  %1045 = vst [vmem:[%s8] sm:$0xff] %v1041
  %1046 = vst [vmem:[%s8 + $0x8] sm:$0xff] %v1042
  %1047 = vst [vmem:[%s8 + $0x10] sm:$0xff] %v1043
  %1048 = vst [vmem:[%s8 + $0x18] sm:$0xff] %v1044
  // Predicated region
  $region34: #{forward.1} parent=0 // pred_check
    _
  $region35: #{forward.1} parent=0 // pred_check_branch
    %1050 = sbr.rel (0) target = $region37
  $region36: #{forward.1} parent=0 // pred_region
    _
  $region37: #{forward.1} parent=0 // pred_fallthru
    _
  // Predicated region
  $region38: #{forward.1} parent=0 // pred_check
    _
  $region39: #{forward.1} parent=0 // pred_check_branch
    %1052 = sbr.rel (0) target = $region41
  $region40: #{forward.1} parent=0 // pred_region
    _
  $region41: #{forward.1} parent=0 // pred_fallthru
    _

</llo_original>
